<compile_context>
chip_gen: v7x
topology: tpu7x:2x2x1
jax: 0.10.0
libtpu: 0.0.40
codegen_flags: <defaults>
</compile_context>

<pallas_src>
import jax
import jax.numpy as jnp
from jax.experimental import pallas as pl
from jax.experimental.pallas import tpu as pltpu

_LANES = 128
_MIB = 1024 * 1024


def _swish_kernel(x_ref, o_ref):
    # Load in storage dtype, compute in f32 (EUP/VPU have >5x headroom over the
    # element rate HBM can deliver, so the upcast is free), store back.
    x = x_ref[...].astype(jnp.float32)
    o_ref[...] = (x * jax.nn.sigmoid(x)).astype(o_ref.dtype)


def _target_block_bytes() -> int:
    """Generation-aware per-buffer block size."""
    try:
        kind = jax.devices()[0].device_kind.lower()
    except Exception:
        return 4 * _MIB
    if "7" in kind:                                   # v7x: 3.2 TB/s, 64 MiB VMEM
        return 8 * _MIB
    if "v6" in kind:                                  # v6e: ~1.4 TB/s
        return 4 * _MIB
    if "v5 lite" in kind or "v5e" in kind or "v5lite" in kind:
        return 2 * _MIB                               # v5e: ~0.82 TB/s
    return 4 * _MIB


def _compiler_params(target_bytes: int) -> pltpu.CompilerParams:
    # 2 double-buffered inputs + 2 outputs = 4 buffers; add headroom and set the
    # scoped VMEM limit explicitly (stays under v7x's 64 MiB physical VMEM).
    vmem_limit = min(max(32 * _MIB, 4 * target_bytes + 8 * _MIB), 56 * _MIB)
    return pltpu.CompilerParams(
        dimension_semantics=("parallel",),
        vmem_limit_bytes=vmem_limit,
    )


def _swish_2d(xf, n, itemsize, target, dtype):
    """n % 128 == 0: lane-dense (R, C) slab, full-width unmasked stores."""
    rows = n // _LANES
    # Widen the lane dim while keeping >= 8 rows (full sublane density).
    width = 1
    for k in (32, 16, 8, 4, 2):
        if rows % k == 0 and rows // k >= 8:
            width = k
            break
    C = _LANES * width
    R = rows // width
    x2d = xf.reshape(R, C)  # contiguous reshape: no HBM copy

    sub = max(8, 32 // itemsize)  # sublane packing: f32 -> 8, bf16 -> 16, i8 -> 32
    block_r = max(target // (C * itemsize), sub)
    block_r -= block_r % sub
    if block_r >= R:
        block_r = R  # full-extent block is always legal
        # Keep >= 2 grid steps on non-tiny inputs so v7x's two TensorCores both
        # get work ("parallel" only helps with >= 2 steps).
        if n * itemsize > _MIB and R >= 2 * sub:
            half = -(-R // 2)
            half = -(-half // sub) * sub
            if half < R:
                block_r = half

    grid = (pl.cdiv(R, block_r),)  # ragged last row-block handled by masking
    return pl.pallas_call(
        _swish_kernel,
        out_shape=jax.ShapeDtypeStruct((R, C), dtype),
        grid_spec=pltpu.PrefetchScalarGridSpec(
            num_scalar_prefetch=0,
            grid=grid,
            in_specs=[pl.BlockSpec((block_r, C), lambda i: (i, 0))],
            out_specs=pl.BlockSpec((block_r, C), lambda i: (i, 0)),
        ),
        compiler_params=_compiler_params(target),
    )(x2d)


def _swish_1d(xf, n, itemsize, target, dtype):
    """n % 128 != 0: flat 1-D layout, no pad / no slice.

    Blocks are multiples of 1024 elements (8x128-aligned); the partial last
    block at the array boundary is covered by Pallas' masked boundary
    writeback (OOB input lanes are never written back).
    """
    block_n = max(target // itemsize, 1024)
    block_n -= block_n % 1024
    if block_n >= n:
        block_n = n  # full-extent block is always legal
        if n * itemsize > _MIB and n >= 2048:
            half = -(-n // 2)
            half = -(-half // 1024) * 1024
            if half < n:
                block_n = half

    grid = (pl.cdiv(n, block_n),)
    return pl.pallas_call(
        _swish_kernel,
        out_shape=jax.ShapeDtypeStruct((n,), dtype),
        grid_spec=pltpu.PrefetchScalarGridSpec(
            num_scalar_prefetch=0,
            grid=grid,
            in_specs=[pl.BlockSpec((block_n,), lambda i: (i,))],
            out_specs=pl.BlockSpec((block_n,), lambda i: (i,)),
        ),
        compiler_params=_compiler_params(target),
    )(xf)


def swish(x: jax.Array, *, block_bytes: int | None = None) -> jax.Array:
    """Elementwise Swish (x * sigmoid(x)). Any shape/dtype; PyTorch semantics."""
    orig_shape = x.shape
    dtype = x.dtype
    n = x.size
    if n == 0:
        return x

    itemsize = jnp.dtype(dtype).itemsize
    target = block_bytes if block_bytes is not None else _target_block_bytes()
    xf = jnp.ravel(x)  # contiguous reshape: no HBM copy

    if n % _LANES == 0:
        out = _swish_2d(xf, n, itemsize, target, dtype)
    else:
        out = _swish_1d(xf, n, itemsize, target, dtype)
    return out.reshape(orig_shape)


if __name__ == "__main__":
    key = jax.random.PRNGKey(0)
    k1, k2, k3 = jax.random.split(key, 3)

    # Primary: NCHW conv-style activation, f32 (n % 128 == 0 -> 2-D slab path).
    x = jax.random.normal(k1, (2, 4, 16, 16), dtype=jnp.float32)
    y = swish(x)
    jax.block_until_ready(y)
    ref = x * jax.nn.sigmoid(x)
    assert y.shape == x.shape and y.dtype == x.dtype
    assert jnp.max(jnp.abs(y - ref)) < 1e-6

    # Ragged flat length (n % 128 != 0), multiple blocks + masked tail block.
    xr = jax.random.normal(k2, (3089,), dtype=jnp.float32)
    yr = swish(xr, block_bytes=4096)  # force several 1024-elem blocks
    jax.block_until_ready(yr)
    refr = xr * jax.nn.sigmoid(xr)
    assert yr.shape == xr.shape and yr.dtype == xr.dtype
    assert jnp.max(jnp.abs(yr - refr)) < 1e-6

    # bf16 storage with f32 internal math.
    xb = jax.random.normal(k3, (2, 4, 16, 16), dtype=jnp.bfloat16)
    yb = swish(xb)
    jax.block_until_ready(yb)
    xb32 = xb.astype(jnp.float32)
    refb = (xb32 * jax.nn.sigmoid(xb32)).astype(jnp.bfloat16)
    assert yb.shape == xb.shape and yb.dtype == jnp.bfloat16
    assert jnp.max(jnp.abs(yb.astype(jnp.float32) - refb.astype(jnp.float32))) < 5e-2

    print("KERNEL_OK")
</pallas_src>

<mosaic_0001>
module attributes {stable_mosaic.version = 11 : i64} {
  func.func @_swish_kernel(%arg0: i32, %arg1: memref<8x256xf32, #tpu.memory_space<vmem>>, %arg2: memref<8x256xf32, #tpu.memory_space<vmem>>) attributes {dimension_semantics = [#tpu.dimension_semantics<parallel>], iteration_bounds = array<i64: 1>, scalar_prefetch = 0 : i64, scratch_operands = 0 : i64, tpu.core_type = #tpu.core_type<tc>, window_params = [{transform_indices = @transform_0, window_bounds = array<i64: 8, 256>}, {transform_indices = @transform_1, window_bounds = array<i64: 8, 256>}]} {
    %c0 = arith.constant 0 : index
    %c0_0 = arith.constant 0 : index
    %0 = vector.load %arg1[%c0, %c0_0] : memref<8x256xf32, #tpu.memory_space<vmem>>, vector<8x256xf32>
    %1 = arith.negf %0 : vector<8x256xf32>
    %2 = math.exp %1 : vector<8x256xf32>
    %cst = arith.constant 1.000000e+00 : f32
    %3 = vector.broadcast %cst : f32 to vector<8x256xf32>
    %4 = arith.addf %3, %2 : vector<8x256xf32>
    %5 = arith.divf %3, %4 : vector<8x256xf32>
    %6 = arith.mulf %0, %5 : vector<8x256xf32>
    %c0_1 = arith.constant 0 : index
    %c0_2 = arith.constant 0 : index
    %7 = vector.load %arg2[%c0_1, %c0_2] : memref<8x256xf32, #tpu.memory_space<vmem>>, vector<8x256xf32>
    tpu.vector_store %arg2[%c0_1, %c0_2], %6 {strides = array<i32>} : memref<8x256xf32, #tpu.memory_space<vmem>>, vector<8x256xf32>,
    return
  }
  func.func @transform_0(%arg0: i32) -> (i32, i32) {
    %c0_i32 = arith.constant 0 : i32
    %c0_i32_0 = arith.constant 0 : i32
    return %arg0, %c0_i32 : i32, i32
  }
  func.func @transform_1(%arg0: i32) -> (i32, i32) {
    %c0_i32 = arith.constant 0 : i32
    %c0_i32_0 = arith.constant 0 : i32
    return %arg0, %c0_i32 : i32, i32
  }
}

</mosaic_0001>

<llo_original>
// kernel: tpu_custom_call.1
$region0: #{tpu_custom_call.1}
  #allocation0 [shape = 'u32[]', space=smem, size = 0x4, offset = 0x4, fixed_abs, tag = 'smem constant byte address 0x4 - core index']
  #allocation1 [shape = 'u32[144,128]{1,0:T(1,128)}', space=vmem, size = 0x12000, scoped, tag = 'internal scratch']
  %s0 = inlined_call_operand.hbm [shape: f32[8,256], index: 0, kind: input, shape index: {}]
  %s1 = inlined_call_operand.hbm [shape: f32[8,256], index: 1, kind: output, shape index: {}]
  %s2 = sld [smem:[#allocation0]]
  $region18: #{tpu_custom_call.1} parent=0
    _
  %s4 = ssub.s32 1, %s2
  %s5 = scalar_select 0, %s4, %s2
  $region1: #{tpu_custom_call.1} parent=0
    #allocation2 [shape = 'u8[8192]{0}', space=vmem, size = 0x2000, scoped, tag = 'input window, operand 0, single buffered']
    #allocation3 [shape = 's32[1]{0}', space=sflag, size = 0x4, scoped, tag = 'scoped memory for tpu_custom_call.1']
    #allocation4 [shape = 's32[1]{0}', space=sflag, size = 0x4, scoped, tag = 'scoped memory for tpu_custom_call.1']
    #allocation5 [shape = 'u8[8192]{0}', space=vmem, size = 0x2000, scoped, tag = 'output window, operand 0, single buffered']
    %6 = vsyncpa [#allocation3], 0
    %7 = vsyncpa [#allocation4], 0
    // Predicated region
    $region2: #{tpu_custom_call.1} parent=1 // pred_check
      _
    $region3: #{tpu_custom_call.1} parent=1 // pred_check_branch
      %9 = sbr.rel (0) target = $region5
    $region4: #{tpu_custom_call.1} parent=1 // pred_region
      %s11 = ssub.s32 256, 256
      %12 = vsyncadd [#allocation3], %s11
      %s14 = sshll.u32 [#allocation2], 4
      %s15 = int_to_ptr.vmem [resolvable:$true] %s14
      %17 = dma.hbm_to_vmem [thread:$0]  %s0, 256, %s15, [#allocation3]
    $region5: #{tpu_custom_call.1} parent=1 // pred_fallthru
      _
    // Predicated region
    $region6: #{tpu_custom_call.1} parent=1 // pred_check
      _
    $region7: #{tpu_custom_call.1} parent=1 // pred_check_branch
      %19 = sbr.rel (0) target = $region9
    $region8: #{tpu_custom_call.1} parent=1 // pred_region
      %20 = dma.done [#allocation3], 256
    $region9: #{tpu_custom_call.1} parent=1 // pred_fallthru
      _
    %v21 = vld [vmem:[#allocation2] sm:$0xff]
    %v22 = vld [vmem:[#allocation2 + $0x8] sm:$0xff]
    %v23 = vxor.u32 %v21, 2147483648
    %v24 = vxor.u32 %v22, 2147483648
    %v25 = vmul.f32 %v23, 1.442695
    %v26 = vpow.pop %v25
    %v27 = vmul.f32 %v24, 1.442695
    %v28 = vpow.pop %v27
    %v29 = vadd.f32 %v26, 1.0
    %v30 = vadd.f32 %v28, 1.0
    %v31 = vrcp.pop %v29
    %v32 = vmul.f32 1.0, %v31
    %v33 = vrcp.pop %v30
    %v34 = vmul.f32 1.0, %v33
    %v35 = vmul.f32 %v21, %v32
    %v36 = vmul.f32 %v22, %v34
    %37 = vst [vmem:[#allocation5] sm:$0xff] %v35
    %38 = vst [vmem:[#allocation5 + $0x8] sm:$0xff] %v36
    // Predicated region
    $region10: #{tpu_custom_call.1} parent=1 // pred_check
      _
    $region11: #{tpu_custom_call.1} parent=1 // pred_check_branch
      %40 = sbr.rel (0) target = $region13
    $region12: #{tpu_custom_call.1} parent=1 // pred_region
      %s42 = ssub.s32 256, 256
      %43 = vsyncadd [#allocation4], %s42
      %s45 = sshll.u32 [#allocation5], 4
      %s46 = int_to_ptr.vmem [resolvable:$true] %s45
      %48 = dma.vmem_to_hbm [thread:$0]  %s46, 256, %s1, [#allocation4]
    $region13: #{tpu_custom_call.1} parent=1 // pred_fallthru
      _
    // Predicated region
    $region14: #{tpu_custom_call.1} parent=1 // pred_check
      _
    $region15: #{tpu_custom_call.1} parent=1 // pred_check_branch
      %50 = sbr.rel (0) target = $region17
    $region16: #{tpu_custom_call.1} parent=1 // pred_region
      %51 = dma.done [#allocation4], 256
    $region17: #{tpu_custom_call.1} parent=1 // pred_fallthru
      _
    %52 = vsyncpa [#allocation3], 1
    %53 = vsyncpa [#allocation4], 1

</llo_original>
